<compile_context>
chip_gen: v7x
topology: tpu7x:2x2x1
jax: 0.10.0
libtpu: 0.0.40
codegen_flags: <defaults>
</compile_context>

<pallas_src>
import math

import jax
import jax.numpy as jnp
from jax import lax
from jax.experimental import pallas as pl
from jax.experimental.pallas import tpu as pltpu


_VMEM_LIMIT = 64 * 1024 * 1024  # explicit scoped-VMEM budget (fits v5e/v6e/v7x)


def _round_up(x, m):
    return ((x + m - 1) // m) * m


def _pick_tile(dim, candidates):
    """Largest candidate that divides dim, else the full dim (safe fallback)."""
    for c in candidates:
        if dim % c == 0:
            return c
    return dim


# ---------------------------------------------------------------------------
# Tiled linear kernel:  (TM, TK) @ (TK, TN) accumulated over K, + bias (1, TN)
# ---------------------------------------------------------------------------
def _linear_kernel(x_ref, w_ref, b_ref, o_ref, acc_ref):
    kk = pl.program_id(2)

    @pl.when(kk == 0)
    def _():
        acc_ref[...] = jnp.zeros(acc_ref.shape, jnp.float32)

    acc_ref[...] += jnp.dot(x_ref[...], w_ref[...],
                            preferred_element_type=jnp.float32)

    @pl.when(kk == pl.num_programs(2) - 1)
    def _():
        o_ref[...] = (acc_ref[...] + b_ref[...]).astype(o_ref.dtype)


def _tiled_linear(x2d, w, b):
    """x2d: (M, d_in); w: (d_in, d_out) pre-transposed; b: (d_out,) -> (M, d_out)."""
    m, d_in = x2d.shape
    d_out = w.shape[1]

    # Row tile capped at 256 (saturates every generation's MXU, fits v5e scoped VMEM);
    # pad M instead of emitting a single full-M block for awkward sizes.
    tm = 256 if m >= 256 else _round_up(m, 8)
    m_pad = _round_up(m, tm)
    if m_pad != m:
        x2d = jnp.pad(x2d, ((0, m_pad - m), (0, 0)))

    tn = _pick_tile(d_out, (512, 256, 128))
    tk = _pick_tile(d_in, (512, 256, 128))

    itemsize = jnp.dtype(x2d.dtype).itemsize
    cost = pl.CostEstimate(
        flops=2 * m_pad * d_in * d_out,
        transcendentals=0,
        bytes_accessed=itemsize * (m_pad * d_in + m_pad * d_out)
        + itemsize * (d_in * d_out + d_out) * (m_pad // tm),
    )

    out = pl.pallas_call(
        _linear_kernel,
        out_shape=jax.ShapeDtypeStruct((m_pad, d_out), x2d.dtype),
        grid_spec=pltpu.PrefetchScalarGridSpec(
            num_scalar_prefetch=0,
            grid=(m_pad // tm, d_out // tn, d_in // tk),
            in_specs=[
                pl.BlockSpec((tm, tk), lambda i, j, k: (i, k)),
                pl.BlockSpec((tk, tn), lambda i, j, k: (k, j)),
                pl.BlockSpec((1, tn), lambda i, j, k: (0, j)),
            ],
            out_specs=pl.BlockSpec((tm, tn), lambda i, j, k: (i, j)),
            scratch_shapes=[pltpu.VMEM((tm, tn), jnp.float32)],
        ),
        compiler_params=pltpu.CompilerParams(
            dimension_semantics=("parallel", "parallel", "arbitrary"),
            vmem_limit_bytes=_VMEM_LIMIT,
        ),
        cost_estimate=cost,
    )(x2d, w, b.reshape(1, d_out))
    return out[:m] if m_pad != m else out


# ---------------------------------------------------------------------------
# Flash-style attention kernel.
# q_ref: (TQ, d_model), k_ref/v_ref: (TK, d_model), optional mask_ref: (TQ, TK) int32.
# Heads are packed along the lane dim (d_model = H * d_k) and processed with a static
# per-head loop; online-softmax state lives in VMEM scratch.
# ---------------------------------------------------------------------------
def _make_flash_kernel(num_heads, d_k, scale, masked):
    def kernel(*refs):
        if masked:
            q_ref, k_ref, v_ref, mask_ref, o_ref, m_ref, l_ref, acc_ref = refs
        else:
            q_ref, k_ref, v_ref, o_ref, m_ref, l_ref, acc_ref = refs
            mask_ref = None

        ki = pl.program_id(2)

        @pl.when(ki == 0)
        def _():
            m_ref[...] = jnp.full(m_ref.shape, -jnp.inf, jnp.float32)
            l_ref[...] = jnp.zeros(l_ref.shape, jnp.float32)
            acc_ref[...] = jnp.zeros(acc_ref.shape, jnp.float32)

        if masked:
            is_masked = mask_ref[...] == 0  # hoisted out of the head loop

        for hh in range(num_heads):
            sl = slice(hh * d_k, (hh + 1) * d_k)
            q_h = q_ref[:, sl] * scale            # fold 1/sqrt(d_k) into q (d_k-wide mul)
            k_h = k_ref[:, sl]
            # QK^T, contraction on the shared d_k axis; f32 accumulation on the MXU.
            s = lax.dot_general(q_h, k_h, (((1,), (1,)), ((), ())),
                                preferred_element_type=jnp.float32)   # (TQ, TK)
            if masked:
                s = jnp.where(is_masked, -1000000000.0, s)

            m_prev = m_ref[hh]                                        # (TQ, 1)
            m_new = jnp.maximum(m_prev, jnp.max(s, axis=-1, keepdims=True))
            alpha = jnp.exp(m_prev - m_new)
            p = jnp.exp(s - m_new)                                    # unnormalized probs
            l_ref[hh] = alpha * l_ref[hh] + jnp.sum(p, axis=-1, keepdims=True)
            pv = lax.dot_general(p.astype(v_ref.dtype), v_ref[:, sl],
                                 (((1,), (0,)), ((), ())),
                                 preferred_element_type=jnp.float32)  # (TQ, d_k)
            acc_ref[hh] = alpha * acc_ref[hh] + pv
            m_ref[hh] = m_new

        @pl.when(ki == pl.num_programs(2) - 1)
        def _():
            for hh in range(num_heads):
                sl = slice(hh * d_k, (hh + 1) * d_k)
                inv = pl.reciprocal(l_ref[hh], approx=True)   # deferred softmax norm (EUP)
                o_ref[:, sl] = (acc_ref[hh] * inv).astype(o_ref.dtype)

    return kernel


def _attention_core(q3, k3, v3, num_heads, mask=None):
    """q3: (B, Sq, d_model); k3/v3: (B, Sk, d_model); heads packed in the last dim.
    Returns the attention context as (B, Sq, d_model), heads still packed."""
    b, sq, d_model = q3.shape
    sk = k3.shape[1]
    d_k = d_model // num_heads
    scale = 1.0 / math.sqrt(d_k)

    tq = _pick_tile(sq, (256, 128))
    tk = _pick_tile(sk, (512, 256, 128))
    # TODO(synk): pad Sk (and mask the padded keys) for sequence lengths that are not a
    #             multiple of 128; the current fallback uses a full-Sk tile.
    nq = sq // tq
    nk = sk // tk

    itemsize = jnp.dtype(q3.dtype).itemsize
    cost = pl.CostEstimate(
        flops=4 * b * num_heads * sq * sk * d_k,
        transcendentals=b * num_heads * sq * sk,
        bytes_accessed=itemsize * (2 * b * sq * d_model            # q read + out write
                                   + 2 * b * nq * sk * d_model)    # k/v streamed per q tile
        + (0 if mask is None else 4 * b * sq * sk),
    )

    q_spec = pl.BlockSpec((None, tq, d_model), lambda b_, qi, ki: (b_, qi, 0))
    k_spec = pl.BlockSpec((None, tk, d_model), lambda b_, qi, ki: (b_, ki, 0))
    v_spec = pl.BlockSpec((None, tk, d_model), lambda b_, qi, ki: (b_, ki, 0))
    out_spec = pl.BlockSpec((None, tq, d_model), lambda b_, qi, ki: (b_, qi, 0))
    scratch = [
        pltpu.VMEM((num_heads, tq, 1), jnp.float32),     # running row max
        pltpu.VMEM((num_heads, tq, 1), jnp.float32),     # running denominator
        pltpu.VMEM((num_heads, tq, d_k), jnp.float32),   # f32 output accumulator
    ]
    params = pltpu.CompilerParams(
        dimension_semantics=("parallel", "parallel", "arbitrary"),
        vmem_limit_bytes=_VMEM_LIMIT,
    )
    out_shape = jax.ShapeDtypeStruct((b, sq, d_model), q3.dtype)
    grid = (b, nq, nk)

    if mask is None:
        kernel = _make_flash_kernel(num_heads, d_k, scale, masked=False)
        return pl.pallas_call(
            kernel,
            out_shape=out_shape,
            grid_spec=pltpu.PrefetchScalarGridSpec(
                num_scalar_prefetch=0, grid=grid,
                in_specs=[q_spec, k_spec, v_spec],
                out_specs=out_spec,
                scratch_shapes=scratch),
            compiler_params=params,
            cost_estimate=cost,
        )(q3, k3, v3)

    # Mask: keep one (1-or-B, 1, Sq, Sk) int32 copy (no per-batch broadcast in HBM).
    mask_arr = jnp.asarray(mask)
    if mask_arr.ndim == 2:        # (Sq, Sk)
        mask_arr = mask_arr[None, None]
    elif mask_arr.ndim == 3:      # (B, Sq, Sk)
        mask_arr = mask_arr[:, None]
    mb = mask_arr.shape[0]
    mask_i = (jnp.broadcast_to(mask_arr, (mb, 1, sq, sk)) != 0).astype(jnp.int32)

    if mb == 1:
        mask_spec = pl.BlockSpec((None, None, tq, tk),
                                 lambda b_, qi, ki: (0, 0, qi, ki))
    else:
        mask_spec = pl.BlockSpec((None, None, tq, tk),
                                 lambda b_, qi, ki: (b_, 0, qi, ki))

    kernel = _make_flash_kernel(num_heads, d_k, scale, masked=True)
    return pl.pallas_call(
        kernel,
        out_shape=out_shape,
        grid_spec=pltpu.PrefetchScalarGridSpec(
            num_scalar_prefetch=0, grid=grid,
            in_specs=[q_spec, k_spec, v_spec, mask_spec],
            out_specs=out_spec,
            scratch_shapes=scratch),
        compiler_params=params,
        cost_estimate=cost,
    )(q3, k3, v3, mask_i)


# ---------------------------------------------------------------------------
# Full MultiHeadedAttention forward
# ---------------------------------------------------------------------------
def multi_headed_attention(query, key, value, wq, bq, wk, bk, wv, bv, wo, bo, h,
                           mask=None):
    """query: (B, Sq, d_model); key/value: (B, Sk, d_model);
    w*: (d_model, d_model) pre-transposed; b*: (d_model,). Returns (B, Sq, d_model)."""
    b, sq, d_model = query.shape
    sk = key.shape[1]

    # 1) input projections (M/N/K-tiled matmul kernels, f32 accumulation)
    q2d = _tiled_linear(query.reshape(b * sq, d_model), wq, bq)
    k2d = _tiled_linear(key.reshape(b * sk, d_model), wk, bk)
    v2d = _tiled_linear(value.reshape(b * sk, d_model), wv, bv)

    # 2) flash attention; heads stay packed in the last dim -> no HBM transposes.
    ctx = _attention_core(q2d.reshape(b, sq, d_model),
                          k2d.reshape(b, sk, d_model),
                          v2d.reshape(b, sk, d_model), h, mask=mask)

    # 3) output projection
    out2d = _tiled_linear(ctx.reshape(b * sq, d_model), wo, bo)
    return out2d.reshape(b, sq, d_model)


# ---------------------------------------------------------------------------
# Pure-JAX reference (mirrors the PyTorch module, inference mode)
# ---------------------------------------------------------------------------
def _reference(query, key, value, wq, bq, wk, bk, wv, bv, wo, bo, h, mask=None):
    b, sq, d_model = query.shape
    sk = key.shape[1]
    d_k = d_model // h
    q = (query @ wq + bq).reshape(b, sq, h, d_k).transpose(0, 2, 1, 3)
    k = (key @ wk + bk).reshape(b, sk, h, d_k).transpose(0, 2, 1, 3)
    v = (value @ wv + bv).reshape(b, sk, h, d_k).transpose(0, 2, 1, 3)
    s = jnp.einsum("bhqd,bhkd->bhqk", q, k) / math.sqrt(d_k)
    if mask is not None:
        s = jnp.where(mask == 0, -1000000000.0, s)
    p = jax.nn.softmax(s, axis=-1)
    x = jnp.einsum("bhqk,bhkd->bhqd", p, v)
    x = x.transpose(0, 2, 1, 3).reshape(b, sq, d_model)
    return x @ wo + bo


if __name__ == "__main__":
    B, S, d_model, h = 2, 8, 32, 4

    key0 = jax.random.PRNGKey(0)
    kx, kwq, kbq, kwk, kbk, kwv, kbv, kwo, kbo = jax.random.split(key0, 9)

    x = jax.random.normal(kx, (B, S, d_model), dtype=jnp.float32)

    lim = 1.0 / math.sqrt(d_model)

    def _w(k):
        return jax.random.uniform(k, (d_model, d_model), minval=-lim, maxval=lim,
                                  dtype=jnp.float32)

    def _b(k):
        return jax.random.uniform(k, (d_model,), minval=-lim, maxval=lim,
                                  dtype=jnp.float32)

    wq, bq = _w(kwq), _b(kbq)
    wk, bk = _w(kwk), _b(kbk)
    wv, bv = _w(kwv), _b(kbv)
    wo, bo = _w(kwo), _b(kbo)

    # Slightly loose tolerance because the softmax denominator uses the hardware
    # approximate reciprocal (pl.reciprocal(..., approx=True)).
    ATOL = RTOL = 2e-3

    # No-mask path (self-attention)
    out = multi_headed_attention(x, x, x, wq, bq, wk, bk, wv, bv, wo, bo, h)
    out = jax.block_until_ready(out)
    ref = _reference(x, x, x, wq, bq, wk, bk, wv, bv, wo, bo, h)
    assert out.shape == (B, S, d_model)
    assert jnp.allclose(out, ref, atol=ATOL, rtol=RTOL), "mismatch vs reference (no mask)"

    # Masked path (causal mask, broadcast over batch and heads)
    mask = jnp.tril(jnp.ones((S, S), dtype=jnp.float32)).reshape(1, 1, S, S)
    out_m = multi_headed_attention(x, x, x, wq, bq, wk, bk, wv, bv, wo, bo, h, mask=mask)
    out_m = jax.block_until_ready(out_m)
    ref_m = _reference(x, x, x, wq, bq, wk, bk, wv, bv, wo, bo, h, mask=mask)
    assert jnp.allclose(out_m, ref_m, atol=ATOL, rtol=RTOL), "mismatch vs reference (mask)"

    print("KERNEL_OK")
</pallas_src>

<mosaic_0001>
module attributes {stable_mosaic.version = 11 : i64} {
  func.func @_linear_kernel(%arg0: i32, %arg1: i32, %arg2: i32, %arg3: memref<16x32xf32, #tpu.memory_space<vmem>>, %arg4: memref<32x32xf32, #tpu.memory_space<vmem>>, %arg5: memref<1x32xf32, #tpu.memory_space<vmem>>, %arg6: memref<16x32xf32, #tpu.memory_space<vmem>>, %arg7: memref<16x32xf32, #tpu.memory_space<vmem>>) attributes {dimension_semantics = [#tpu.dimension_semantics<parallel>, #tpu.dimension_semantics<parallel>, #tpu.dimension_semantics<arbitrary>], iteration_bounds = array<i64: 1, 1, 1>, scalar_prefetch = 0 : i64, scratch_operands = 1 : i64, tpu.core_type = #tpu.core_type<tc>, window_params = [{transform_indices = @transform_0, window_bounds = array<i64: 16, 32>}, {transform_indices = @transform_1, window_bounds = array<i64: 32, 32>}, {transform_indices = @transform_2, window_bounds = array<i64: 1, 32>}, {transform_indices = @transform_3, window_bounds = array<i64: 16, 32>}]} {
    %c0_i32 = arith.constant 0 : i32
    %0 = arith.cmpi eq, %arg2, %c0_i32 : i32
    %1 = arith.extui %0 : i1 to i32
    %c0_i32_0 = arith.constant 0 : i32
    %2 = arith.cmpi ne, %1, %c0_i32_0 : i32
    scf.if %2 {
      %cst_10 = arith.constant 0.000000e+00 : f32
      %12 = vector.broadcast %cst_10 : f32 to vector<16x32xf32>
      %c0_11 = arith.constant 0 : index
      %c0_12 = arith.constant 0 : index
      %13 = vector.load %arg7[%c0_11, %c0_12] : memref<16x32xf32, #tpu.memory_space<vmem>>, vector<16x32xf32>
      tpu.vector_store %arg7[%c0_11, %c0_12], %12 {strides = array<i32>} : memref<16x32xf32, #tpu.memory_space<vmem>>, vector<16x32xf32>,
    } else {
    }
    %c0 = arith.constant 0 : index
    %c0_1 = arith.constant 0 : index
    %3 = vector.load %arg7[%c0, %c0_1] : memref<16x32xf32, #tpu.memory_space<vmem>>, vector<16x32xf32>
    %c0_2 = arith.constant 0 : index
    %c0_3 = arith.constant 0 : index
    %4 = vector.load %arg3[%c0_2, %c0_3] : memref<16x32xf32, #tpu.memory_space<vmem>>, vector<16x32xf32>
    %c0_4 = arith.constant 0 : index
    %c0_5 = arith.constant 0 : index
    %5 = vector.load %arg4[%c0_4, %c0_5] : memref<32x32xf32, #tpu.memory_space<vmem>>, vector<32x32xf32>
    %cst = arith.constant dense<0.000000e+00> : vector<16x32xf32>
    %6 = tpu.matmul %4, %5, %cst {dimension_numbers = #tpu.dot_dimension_numbers<[1], [0], [0], [1], [0, 0, 1, 1], [], []>} : vector<16x32xf32>, vector<32x32xf32>, vector<16x32xf32> -> vector<16x32xf32>
    %7 = arith.addf %3, %6 : vector<16x32xf32>
    %c0_6 = arith.constant 0 : index
    %c0_7 = arith.constant 0 : index
    %8 = vector.load %arg7[%c0_6, %c0_7] : memref<16x32xf32, #tpu.memory_space<vmem>>, vector<16x32xf32>
    tpu.vector_store %arg7[%c0_6, %c0_7], %7 {strides = array<i32>} : memref<16x32xf32, #tpu.memory_space<vmem>>, vector<16x32xf32>,
    %c0_i32_8 = arith.constant 0 : i32
    %9 = arith.cmpi eq, %arg2, %c0_i32_8 : i32
    %10 = arith.extui %9 : i1 to i32
    %c0_i32_9 = arith.constant 0 : i32
    %11 = arith.cmpi ne, %10, %c0_i32_9 : i32
    scf.if %11 {
      %c0_10 = arith.constant 0 : index
      %c0_11 = arith.constant 0 : index
      %12 = vector.load %arg7[%c0_10, %c0_11] : memref<16x32xf32, #tpu.memory_space<vmem>>, vector<16x32xf32>
      %c0_12 = arith.constant 0 : index
      %c0_13 = arith.constant 0 : index
      %13 = vector.load %arg5[%c0_12, %c0_13] : memref<1x32xf32, #tpu.memory_space<vmem>>, vector<1x32xf32>
      %14 = vector.broadcast %13 : vector<1x32xf32> to vector<16x32xf32>
      %15 = arith.addf %12, %14 : vector<16x32xf32>
      %c0_14 = arith.constant 0 : index
      %c0_15 = arith.constant 0 : index
      %16 = vector.load %arg6[%c0_14, %c0_15] : memref<16x32xf32, #tpu.memory_space<vmem>>, vector<16x32xf32>
      tpu.vector_store %arg6[%c0_14, %c0_15], %15 {strides = array<i32>} : memref<16x32xf32, #tpu.memory_space<vmem>>, vector<16x32xf32>,
    } else {
    }
    return
  }
  func.func @transform_0(%arg0: i32, %arg1: i32, %arg2: i32) -> (i32, i32) {
    %c0_i32 = arith.constant 0 : i32
    return %arg0, %arg2 : i32, i32
  }
  func.func @transform_1(%arg0: i32, %arg1: i32, %arg2: i32) -> (i32, i32) {
    %c0_i32 = arith.constant 0 : i32
    return %arg2, %arg1 : i32, i32
  }
  func.func @transform_2(%arg0: i32, %arg1: i32, %arg2: i32) -> (i32, i32) {
    %c0_i32 = arith.constant 0 : i32
    %c0_i32_0 = arith.constant 0 : i32
    return %c0_i32, %arg1 : i32, i32
  }
  func.func @transform_3(%arg0: i32, %arg1: i32, %arg2: i32) -> (i32, i32) {
    %c0_i32 = arith.constant 0 : i32
    return %arg0, %arg1 : i32, i32
  }
}

</mosaic_0001>

<llo_original>
// kernel: tpu_custom_call.1
$region0: #{tpu_custom_call.1}
  #allocation0 [shape = 'u32[]', space=smem, size = 0x4, offset = 0x4, fixed_abs, tag = 'smem constant byte address 0x4 - core index']
  #allocation1 [shape = 'u32[144,128]{1,0:T(1,128)}', space=vmem, size = 0x12000, scoped, tag = 'internal scratch']
  #allocation2 [shape = 'f32[16,32]{1,0:T(8,128)}', space=vmem, size = 0x2000, scoped, tag = 'scratch operand']
  %s0 = inlined_call_operand.hbm [shape: f32[16,32], index: 0, kind: input, shape index: {}]
  %s1 = inlined_call_operand.hbm [shape: f32[32,32], index: 1, kind: input, shape index: {}]
  %s2 = inlined_call_operand.hbm [shape: f32[1,32], index: 2, kind: input, shape index: {}]
  %s3 = inlined_call_operand.hbm [shape: f32[16,32], index: 3, kind: output, shape index: {}]
  %s4 = sld [smem:[#allocation0]]
  $region42: #{tpu_custom_call.1} parent=0
    _
  %s6 = ssub.s32 1, %s4
  %s7 = scalar_select 0, %s6, %s4
  $region1: #{tpu_custom_call.1} parent=0
    #allocation3 [shape = 'u8[8192]{0}', space=vmem, size = 0x2000, scoped, tag = 'input window, operand 0, single buffered']
    #allocation4 [shape = 's32[1]{0}', space=sflag, size = 0x4, scoped, tag = 'scoped memory for tpu_custom_call.1']
    #allocation5 [shape = 's32[1]{0}', space=sflag, size = 0x4, scoped, tag = 'scoped memory for tpu_custom_call.1']
    #allocation6 [shape = 'u8[16384]{0}', space=vmem, size = 0x4000, scoped, tag = 'input window, operand 1, single buffered']
    #allocation7 [shape = 's32[1]{0}', space=sflag, size = 0x4, scoped, tag = 'scoped memory for tpu_custom_call.1']
    #allocation8 [shape = 'u8[512]{0}', space=vmem, size = 0x400, scoped, tag = 'input window, operand 2, single buffered']
    #allocation9 [shape = 'u8[8192]{0}', space=vmem, size = 0x2000, scoped, tag = 'output window, operand 0, single buffered']
    %8 = vsyncpa [#allocation4], 0
    %9 = vsyncpa [#allocation7], 0
    %10 = vsyncpa [#allocation5], 0
    // Predicated region
    $region2: #{tpu_custom_call.1} parent=1 // pred_check
      _
    $region3: #{tpu_custom_call.1} parent=1 // pred_check_branch
      %12 = sbr.rel (0) target = $region5
    $region4: #{tpu_custom_call.1} parent=1 // pred_region
      %s14 = ssub.s32 256, 256
      %15 = vsyncadd [#allocation4], %s14
      %s16 = sshll.u32 [#allocation3], 4
      %s17 = int_to_ptr.vmem [resolvable:$true] %s16
      %22 = dma.hbm_to_vmem [thread:$0]  %s0, 256, %s17, [#allocation4], 128, 128, 8
    $region5: #{tpu_custom_call.1} parent=1 // pred_fallthru
      _
    // Predicated region
    $region6: #{tpu_custom_call.1} parent=1 // pred_check
      _
    $region7: #{tpu_custom_call.1} parent=1 // pred_check_branch
      %24 = sbr.rel (0) target = $region9
    $region8: #{tpu_custom_call.1} parent=1 // pred_region
      %s26 = ssub.s32 512, 512
      %27 = vsyncadd [#allocation7], %s26
      %s28 = sshll.u32 [#allocation6], 4
      %s29 = int_to_ptr.vmem [resolvable:$true] %s28
      %34 = dma.hbm_to_vmem [thread:$0]  %s1, 512, %s29, [#allocation7], 128, 128, 8
    $region9: #{tpu_custom_call.1} parent=1 // pred_fallthru
      _
    // Predicated region
    $region10: #{tpu_custom_call.1} parent=1 // pred_check
      _
    $region11: #{tpu_custom_call.1} parent=1 // pred_check_branch
      %36 = sbr.rel (0) target = $region13
    $region12: #{tpu_custom_call.1} parent=1 // pred_region
      %s38 = ssub.s32 16, 16
      %39 = vsyncadd [#allocation7], %s38
      %s41 = sshll.u32 [#allocation8], 4
      %s42 = int_to_ptr.vmem [resolvable:$true] %s41
      %44 = dma.hbm_to_vmem [thread:$0]  %s2, 16, %s42, [#allocation7]
    $region13: #{tpu_custom_call.1} parent=1 // pred_fallthru
      _
    // Predicated region
    $region14: #{tpu_custom_call.1} parent=1 // pred_check
      _
    $region15: #{tpu_custom_call.1} parent=1 // pred_check_branch
      %46 = sbr.rel (0) target = $region17
    $region16: #{tpu_custom_call.1} parent=1 // pred_region
      %47 = dma.done [#allocation4], 256
    $region17: #{tpu_custom_call.1} parent=1 // pred_fallthru
      _
    // Predicated region
    $region18: #{tpu_custom_call.1} parent=1 // pred_check
      _
    $region19: #{tpu_custom_call.1} parent=1 // pred_check_branch
      %49 = sbr.rel (0) target = $region21
    $region20: #{tpu_custom_call.1} parent=1 // pred_region
      %50 = dma.done [#allocation7], 512
    $region21: #{tpu_custom_call.1} parent=1 // pred_fallthru
      _
    // Predicated region
    $region22: #{tpu_custom_call.1} parent=1 // pred_check
      _
    $region23: #{tpu_custom_call.1} parent=1 // pred_check_branch
      %52 = sbr.rel (0) target = $region25
    $region24: #{tpu_custom_call.1} parent=1 // pred_region
      %53 = dma.done [#allocation7], 16
    $region25: #{tpu_custom_call.1} parent=1 // pred_fallthru
      _
    %p54 = scmp.eq.s32.totalorder 0, 0
    // Predicated region
    $region26: #{tpu_custom_call.1} parent=1 // pred_check
      %p55 = pneg %p54
    $region27: #{tpu_custom_call.1} parent=1 // pred_check_branch
      %57 = sbr.rel (%p55) target = $region29
    $region28: #{tpu_custom_call.1} parent=1 // pred_region
      %vm58 = vcmask 261120
      %59 = vst.msk [vmem:[#allocation2] sm:$0xff] %vm58, 0.0
      %60 = vst.msk [vmem:[#allocation2 + $0x8] sm:$0xff] %vm58, 0.0
    $region29: #{tpu_custom_call.1} parent=1 // pred_fallthru
      _
    %v61 = vld [vmem:[#allocation2] sm:$0xff]
    %v62 = vld [vmem:[#allocation2 + $0x8] sm:$0xff]
    %v63 = vld [vmem:[#allocation3] sm:$0xff]
    %v64 = vld [vmem:[#allocation3 + $0x8] sm:$0xff]
    %v65 = vld [vmem:[#allocation6] sm:$0xff]
    %v66 = vld [vmem:[#allocation6 + $0x8] sm:$0xff]
    %v67 = vld [vmem:[#allocation6 + $0x10] sm:$0xff]
    %v68 = vld [vmem:[#allocation6 + $0x18] sm:$0xff]
    %vm69 = vcmask 261120
    %v71 = vsel %vm69, %v63, 0
    %v74 = vsel %vm69, %v64, 0
    %76 = vmatprep.subr.mxu0 0.0
    %77 = vmatpush1.msra.mxu0 %v65
    %78 = vmatprep.subr.mxu0 0.0
    %79 = vmatpush1.msra.mxu0 %v66
    %80 = vmatprep.subr.mxu0 0.0
    %81 = vmatpush1.msra.mxu0 %v67
    %82 = vmatprep.subr.mxu0 0.0
    %83 = vmatpush1.msra.mxu0 %v68
    %84 = vmatprep.subr.mxu0 0.0
    %85 = vmatpush1.msra.mxu0 0.0
    %86 = vmatprep.subr.mxu0 0.0
    %87 = vmatpush1.msra.mxu0 0.0
    %88 = vmatprep.subr.mxu0 0.0
    %89 = vmatpush1.msra.mxu0 0.0
    %90 = vmatprep.subr.mxu0 0.0
    %91 = vmatpush1.msra.mxu0 0.0
    %92 = vmatprep.subr.mxu0 0.0
    %93 = vmatpush1.msra.mxu0 0.0
    %94 = vmatprep.subr.mxu0 0.0
    %95 = vmatpush1.msra.mxu0 0.0
    %96 = vmatprep.subr.mxu0 0.0
    %97 = vmatpush1.msra.mxu0 0.0
    %98 = vmatprep.subr.mxu0 0.0
    %99 = vmatpush1.msra.mxu0 0.0
    %100 = vmatprep.subr.mxu0 0.0
    %101 = vmatpush1.msra.mxu0 0.0
    %102 = vmatprep.subr.mxu0 0.0
    %103 = vmatpush1.msra.mxu0 0.0
    %104 = vmatprep.subr.mxu0 0.0
    %105 = vmatpush1.msra.mxu0 0.0
    %106 = vmatprep.subr.mxu0 0.0
    %107 = vmatpush1.msra.mxu0 0.0
    %108 = vmatprep.subr.mxu0 0.0
    %109 = vmatpush1.msra.mxu0 0.0
    %110 = vmatprep.subr.mxu0 0.0
    %111 = vmatpush1.msra.mxu0 0.0
    %112 = vmatprep.subr.mxu0 0.0
    %113 = vmatpush1.msra.mxu0 0.0
    %114 = vmatprep.subr.mxu0 0.0
    %115 = vmatpush1.msra.mxu0 0.0
    %116 = vmatprep.subr.mxu0 0.0
    %117 = vmatpush1.msra.mxu0 0.0
    %118 = vmatprep.subr.mxu0 0.0
    %119 = vmatpush1.msra.mxu0 0.0
    %120 = vmatprep.subr.mxu0 0.0
    %121 = vmatpush1.msra.mxu0 0.0
    %122 = vmatprep.subr.mxu0 0.0
    %123 = vmatpush1.msra.mxu0 0.0
    %124 = vmatprep.subr.mxu0 0.0
    %125 = vmatpush1.msra.mxu0 0.0
    %126 = vmatprep.subr.mxu0 0.0
    %127 = vmatpush1.msra.mxu0 0.0
    %128 = vmatprep.subr.mxu0 0.0
    %129 = vmatpush1.msra.mxu0 0.0
    %130 = vmatprep.subr.mxu0 0.0
    %131 = vmatpush1.msra.mxu0 0.0
    %132 = vmatprep.subr.mxu0 0.0
    %133 = vmatpush1.msra.mxu0 0.0
    %134 = vmatprep.subr.mxu0 0.0
    %135 = vmatpush1.msra.mxu0 0.0
    %136 = vmatprep.subr.mxu0 0.0
    %137 = vmatpush1.msra.mxu0 0.0
    %138 = vmatprep.subr.mxu0 0.0
    %139 = vmatpush1.msra.mxu0 0.0
    %140 = vmatprep.mubr.f32.mxu0 0.0
    %141 = vmatmul.mubr.f32.gmra.mrb[0].mxu0 %v71
    %v142 = vpop.f32.mrb[0].mxu0
    %v143 = vadd.f32 0.0, %v142
    %v144 = vpop.f32.mrb[0].mxu0
    %145 = vmatprep.mubr.f32.mxu0 0.0
    %146 = vmatmul.mubr.f32.gmra.mrb[0].mxu0 %v74
    %v147 = vpop.f32.mrb[0].mxu0
    %v148 = vadd.f32 0.0, %v147
    %v149 = vpop.f32.mrb[0].mxu0
    %150 = vdwg.mxu0
    %v151 = vadd.f32 %v61, %v143
    %v152 = vadd.f32 %v62, %v148
    %153 = vst.msk [vmem:[#allocation2] sm:$0xff] %vm69, %v151
    %154 = vst.msk [vmem:[#allocation2 + $0x8] sm:$0xff] %vm69, %v152
    // Predicated region
    $region30: #{tpu_custom_call.1} parent=1 // pred_check
      %p155 = pneg %p54
    $region31: #{tpu_custom_call.1} parent=1 // pred_check_branch
      %157 = sbr.rel (%p155) target = $region33
    $region32: #{tpu_custom_call.1} parent=1 // pred_region
      %v158 = vld [vmem:[#allocation2] sm:$0xff]
      %v159 = vld [vmem:[#allocation2 + $0x8] sm:$0xff]
      %v160 = vld [vmem:[#allocation8] sm:$0x1]
      %v162 = vlaneseq
      %v163 = vshrl.u32 %v162, 7
      %v164 = vsub.s32 0, %v163
      %v165 = vrot.slane %v160, %v164
      %v167 = vadd.f32 %v158, %v165
      %v168 = vadd.f32 %v159, %v165
      %169 = vst.msk [vmem:[#allocation9] sm:$0xff] %vm69, %v167
      %170 = vst.msk [vmem:[#allocation9 + $0x8] sm:$0xff] %vm69, %v168
    $region33: #{tpu_custom_call.1} parent=1 // pred_fallthru
      _
    // Predicated region
    $region34: #{tpu_custom_call.1} parent=1 // pred_check
      _
    $region35: #{tpu_custom_call.1} parent=1 // pred_check_branch
      %172 = sbr.rel (0) target = $region37
    $region36: #{tpu_custom_call.1} parent=1 // pred_region
      %s174 = ssub.s32 256, 256
      %175 = vsyncadd [#allocation5], %s174
      %s176 = sshll.u32 [#allocation9], 4
      %s177 = int_to_ptr.vmem [resolvable:$true] %s176
      %182 = dma.vmem_to_hbm [thread:$0]  %s177, 256, %s3, [#allocation5], 128, 128, 8
    $region37: #{tpu_custom_call.1} parent=1 // pred_fallthru
      _
    // Predicated region
    $region38: #{tpu_custom_call.1} parent=1 // pred_check
      _
    $region39: #{tpu_custom_call.1} parent=1 // pred_check_branch
      %184 = sbr.rel (0) target = $region41
    $region40: #{tpu_custom_call.1} parent=1 // pred_region
      %185 = dma.done [#allocation5], 256
    $region41: #{tpu_custom_call.1} parent=1 // pred_fallthru
      _
    %186 = vsyncpa [#allocation4], 1
    %187 = vsyncpa [#allocation7], 1
    %188 = vsyncpa [#allocation5], 1

</llo_original>
